<compile_context>
chip_gen: v5e
topology: v5e:2x2
jax: 0.10.0
libtpu: 0.0.40
codegen_flags: <defaults>
</compile_context>

<pallas_src>
import functools

import jax
import jax.numpy as jnp
from jax import lax
from jax.experimental import pallas as pl
from jax.experimental.pallas import tpu as pltpu

EPS = 1e-5


def cond_bn1d_kernel(gamma_ref, beta_ref, x_ref, o_ref, *, inv_count):
    # Block shapes for one channel tile:
    #   gamma_ref: (N, TC, 1)  per-(sample, channel) scale (precomputed in XLA)
    #   beta_ref : (N, TC, 1)  per-(sample, channel) shift
    #   x_ref    : (N, TC, L)  input tile (L = whole sequence axis)
    #   o_ref    : (N, TC, L)  output tile
    x = x_ref[...].astype(jnp.float32)                       # (N, TC, L)

    # --- single-pass per-channel statistics over (N, L), biased variance ------
    s1 = jnp.sum(x, axis=(0, 2), keepdims=True)              # (1, TC, 1)
    s2 = jnp.sum(x * x, axis=(0, 2), keepdims=True)          # (1, TC, 1)
    mean = s1 * inv_count
    # Clamp: E[x^2] - E[x]^2 can go slightly negative from cancellation.
    var = jnp.maximum(s2 * inv_count - mean * mean, 0.0)
    inv_std = lax.rsqrt(var + EPS)                            # (1, TC, 1)  (EUP slot)

    gamma = gamma_ref[...].astype(jnp.float32)                # (N, TC, 1)
    beta = beta_ref[...].astype(jnp.float32)                  # (N, TC, 1)

    # out = gamma * (x - mean) * inv_std + beta  ==  scale * x + shift  (one FMA pass)
    scale = gamma * inv_std                                   # (N, TC, 1)
    shift = beta - scale * mean                               # (N, TC, 1)
    o_ref[...] = (x * scale + shift).astype(o_ref.dtype)


def _vmem_limit_bytes():
    """Generation-aware scoped-VMEM limit.

    v5e/v6e have 128 MiB physical VMEM per TensorCore -> allow ~96 MiB.
    v7x has only 64 MiB per TensorCore                -> cap at ~48 MiB.
    Unknown / undetectable chips fall back to the v7x-safe cap.
    """
    cap = None
    try:
        cap = getattr(pltpu.get_tpu_info(), "vmem_capacity_bytes", None)
    except Exception:
        cap = None
    if not cap:
        try:
            kind = jax.devices()[0].device_kind.lower()
        except Exception:
            kind = ""
        if ("v5" in kind) or ("v6" in kind):
            cap = 128 * 1024 * 1024
        else:
            cap = 64 * 1024 * 1024  # v7x-safe default
    # ~25% headroom for Mosaic internal scratch; never request more than 96 MiB.
    return min((int(cap) * 3) // 4, 96 * 1024 * 1024)


def _pick_channel_tile(n, c, l, dtype, vmem_limit_bytes):
    """Pick the channel tile TC such that
       (a) TC is a multiple of the dtype's sublane granularity (8 f32 / 16 bf16 / 32 i8)
           or TC == C (ragged channel counts),
       (b) TC divides C,
       (c) 2x(in block) + 2x(out block) stays around ~65% of the scoped-VMEM limit,
       (d) the channel grid has >= 2 steps when C allows it (both v7x TensorCores busy).
    """
    itemsize = jnp.dtype(dtype).itemsize
    sub = max(8, 32 // itemsize)
    bytes_per_channel = max(n * l * itemsize, 1)
    per_block_budget = int(vmem_limit_bytes * 0.65) // 4  # in + out, double-buffered

    if c % sub != 0:
        # Ragged channel count: one block covering all channels (must fit).
        # TODO(synk): pad C to the sublane granularity in the wrapper to tile ragged C.
        if c * bytes_per_channel > per_block_budget:
            raise ValueError(
                f"ConditionalBatchNorm1d block (N={n}, C={c}, L={l}, {dtype}) exceeds the "
                f"per-block VMEM budget ({per_block_budget} B) and C is not a multiple of "
                f"{sub}; reduce the shapes or pad C.")
        return c

    max_tc = per_block_budget // bytes_per_channel
    if max_tc < sub:
        # TODO(synk): fall back to a two-phase (C_tile, L_tile) grid accumulating s1/s2
        #             in VMEM scratch, then an apply pass (one extra HBM read of x).
        raise ValueError(
            f"Minimum channel tile (N={n}, TC={sub}, L={l}, {dtype}) exceeds the per-block "
            f"VMEM budget ({per_block_budget} B); an L-tiled two-pass kernel is required.")

    best = sub
    tc = sub
    while tc <= min(c, max_tc):
        if c % tc == 0:
            best = tc
        tc += sub

    # v7x has 2 TensorCores: a 1-step "parallel" grid leaves one idle, so split the
    # full-C tile into >= 2 steps when C divides cleanly.
    if best == c and c > sub:
        for cand in range(c - sub, sub - 1, -sub):
            if c % cand == 0:
                best = cand
                break
    return best


def conditional_batchnorm1d(x, y, embed_weight, *, block_c=None):
    """Forward pass of ConditionalBatchNorm1d.

    x:            (N, C, L) activations
    y:            (N, K)    class weights (one-hot or soft)
    embed_weight: (K, 2C)   [:, :C] -> gamma, [:, C:] -> beta
    """
    n, c, l = x.shape
    k = y.shape[1]
    assert embed_weight.shape == (k, 2 * c)

    # Hoist the conditional affine out of the kernel: one tiny (N,K)@(K,2C) matmul in
    # XLA, instead of a padded-K MXU contraction repeated for every channel tile.
    emb = jnp.dot(y.astype(jnp.float32), embed_weight.astype(jnp.float32))  # (N, 2C)
    gamma = emb[:, :c].reshape(n, c, 1)                                      # (N, C, 1)
    beta = emb[:, c:].reshape(n, c, 1)                                       # (N, C, 1)

    vmem_limit = _vmem_limit_bytes()

    itemsize = jnp.dtype(x.dtype).itemsize
    sub = max(8, 32 // itemsize)
    if block_c is not None:
        tc = block_c
        if not (tc == c or (tc % sub == 0 and c % tc == 0)):
            raise ValueError(
                f"block_c={tc} must equal C or be a multiple of {sub} dividing C={c}")
    else:
        tc = _pick_channel_tile(n, c, l, x.dtype, vmem_limit)
    grid = (pl.cdiv(c, tc),)

    # TODO(synk): if a production L is not a multiple of 128, pad/restructure so output
    #             stores stay lane-dense; here L is kept whole per block.

    kernel = functools.partial(cond_bn1d_kernel, inv_count=1.0 / float(n * l))

    return pl.pallas_call(
        kernel,
        out_shape=jax.ShapeDtypeStruct((n, c, l), x.dtype),
        grid_spec=pltpu.PrefetchScalarGridSpec(
            num_scalar_prefetch=0,
            grid=grid,
            in_specs=[
                pl.BlockSpec((n, tc, 1), lambda i: (0, i, 0)),    # gamma tile
                pl.BlockSpec((n, tc, 1), lambda i: (0, i, 0)),    # beta tile
                pl.BlockSpec((n, tc, l), lambda i: (0, i, 0)),    # x channel tile
            ],
            out_specs=pl.BlockSpec((n, tc, l), lambda i: (0, i, 0)),
        ),
        compiler_params=pltpu.CompilerParams(
            # channel tiles are independent -> shard across TensorCores on v7x
            dimension_semantics=("parallel",),
            vmem_limit_bytes=int(vmem_limit),
        ),
    )(gamma, beta, x)


def reference(x, y, embed_weight):
    n, c, l = x.shape
    mean = jnp.mean(x, axis=(0, 2), keepdims=True)
    var = jnp.mean((x - mean) ** 2, axis=(0, 2), keepdims=True)
    x_hat = (x - mean) / jnp.sqrt(var + EPS)
    emb = y @ embed_weight
    gamma = emb[:, :c].reshape(n, c, 1)
    beta = emb[:, c:].reshape(n, c, 1)
    return gamma * x_hat + beta


if __name__ == "__main__":
    # Small shapes consistent with the module: x (batch, num_features, seq_len),
    # y (batch, num_classes). seq_len multiple of 128 -> lane-dense stores.
    batch, num_features, seq_len, num_classes = 4, 32, 256, 10

    key = jax.random.PRNGKey(0)
    kx, kw, kb, ky = jax.random.split(key, 4)

    x = jax.random.normal(kx, (batch, num_features, seq_len), dtype=jnp.float32)

    # gamma half initialized ~ N(1, 0.02) as in the PyTorch __init__; beta half given
    # small nonzero values so the beta path is actually exercised by the check.
    gamma_part = 1.0 + 0.02 * jax.random.normal(
        kw, (num_classes, num_features), dtype=jnp.float32
    )
    beta_part = 0.05 * jax.random.normal(
        kb, (num_classes, num_features), dtype=jnp.float32
    )
    embed_weight = jnp.concatenate([gamma_part, beta_part], axis=1)  # (K, 2C)

    labels = jax.random.randint(ky, (batch,), 0, num_classes)
    y = jax.nn.one_hot(labels, num_classes, dtype=jnp.float32)

    ref = reference(x, y, embed_weight)

    # Auto-tiled path (generation-aware tile / VMEM budget, >= 2 grid steps).
    out = jax.block_until_ready(conditional_batchnorm1d(x, y, embed_weight))
    assert out.shape == ref.shape and out.dtype == ref.dtype
    err = jnp.max(jnp.abs(out - ref))
    assert jnp.allclose(out, ref, atol=1e-4, rtol=1e-4), f"auto-tile mismatch, max|diff|={err}"

    # Explicit small tile to exercise a longer (4-step) channel grid.
    out8 = jax.block_until_ready(conditional_batchnorm1d(x, y, embed_weight, block_c=8))
    err8 = jnp.max(jnp.abs(out8 - ref))
    assert jnp.allclose(out8, ref, atol=1e-4, rtol=1e-4), f"block_c=8 mismatch, max|diff|={err8}"

    print("KERNEL_OK")
</pallas_src>

<mosaic_0001>
module attributes {stable_mosaic.version = 11 : i64} {
  func.func @cond_bn1d_kernel(%arg0: i32, %arg1: memref<4x16x1xf32, #tpu.memory_space<vmem>>, %arg2: memref<4x16x1xf32, #tpu.memory_space<vmem>>, %arg3: memref<4x16x256xf32, #tpu.memory_space<vmem>>, %arg4: memref<4x16x256xf32, #tpu.memory_space<vmem>>) attributes {dimension_semantics = [#tpu.dimension_semantics<parallel>], iteration_bounds = array<i64: 2>, scalar_prefetch = 0 : i64, scratch_operands = 0 : i64, tpu.core_type = #tpu.core_type<tc>, window_params = [{transform_indices = @transform_0, window_bounds = array<i64: 4, 16, 1>}, {transform_indices = @transform_1, window_bounds = array<i64: 4, 16, 1>}, {transform_indices = @transform_2, window_bounds = array<i64: 4, 16, 256>}, {transform_indices = @transform_3, window_bounds = array<i64: 4, 16, 256>}]} {
    %c0 = arith.constant 0 : index
    %c0_0 = arith.constant 0 : index
    %c0_1 = arith.constant 0 : index
    %0 = vector.load %arg3[%c0, %c0_0, %c0_1] : memref<4x16x256xf32, #tpu.memory_space<vmem>>, vector<4x16x256xf32>
    %cst = arith.constant dense<0.000000e+00> : vector<16xf32>
    %1 = vector.multi_reduction <add>, %0, %cst [0, 2] : vector<4x16x256xf32> to vector<16xf32>
    %2 = vector.shape_cast %1 : vector<16xf32> to vector<1x16x1xf32>
    %3 = arith.mulf %0, %0 : vector<4x16x256xf32>
    %cst_2 = arith.constant dense<0.000000e+00> : vector<16xf32>
    %4 = vector.multi_reduction <add>, %3, %cst_2 [0, 2] : vector<4x16x256xf32> to vector<16xf32>
    %5 = vector.shape_cast %4 : vector<16xf32> to vector<1x16x1xf32>
    %cst_3 = arith.constant 9.765625E-4 : f32
    %6 = vector.broadcast %cst_3 : f32 to vector<1x16x1xf32>
    %7 = arith.mulf %2, %6 : vector<1x16x1xf32>
    %cst_4 = arith.constant 9.765625E-4 : f32
    %8 = vector.broadcast %cst_4 : f32 to vector<1x16x1xf32>
    %9 = arith.mulf %5, %8 : vector<1x16x1xf32>
    %10 = arith.mulf %7, %7 : vector<1x16x1xf32>
    %11 = arith.subf %9, %10 : vector<1x16x1xf32>
    %cst_5 = arith.constant 0.000000e+00 : f32
    %12 = vector.broadcast %cst_5 : f32 to vector<1x16x1xf32>
    %13 = arith.maximumf %11, %12 : vector<1x16x1xf32>
    %cst_6 = arith.constant 9.99999974E-6 : f32
    %14 = vector.broadcast %cst_6 : f32 to vector<1x16x1xf32>
    %15 = arith.addf %13, %14 : vector<1x16x1xf32>
    %16 = math.rsqrt %15 : vector<1x16x1xf32>
    %c0_7 = arith.constant 0 : index
    %c0_8 = arith.constant 0 : index
    %c0_9 = arith.constant 0 : index
    %17 = vector.load %arg1[%c0_7, %c0_8, %c0_9] : memref<4x16x1xf32, #tpu.memory_space<vmem>>, vector<4x16x1xf32>
    %c0_10 = arith.constant 0 : index
    %c0_11 = arith.constant 0 : index
    %c0_12 = arith.constant 0 : index
    %18 = vector.load %arg2[%c0_10, %c0_11, %c0_12] : memref<4x16x1xf32, #tpu.memory_space<vmem>>, vector<4x16x1xf32>
    %19 = vector.broadcast %16 : vector<1x16x1xf32> to vector<4x16x1xf32>
    %20 = arith.mulf %17, %19 : vector<4x16x1xf32>
    %21 = vector.broadcast %7 : vector<1x16x1xf32> to vector<4x16x1xf32>
    %22 = arith.mulf %20, %21 : vector<4x16x1xf32>
    %23 = arith.subf %18, %22 : vector<4x16x1xf32>
    %24 = vector.broadcast %20 : vector<4x16x1xf32> to vector<4x16x256xf32>
    %25 = arith.mulf %0, %24 : vector<4x16x256xf32>
    %26 = vector.broadcast %23 : vector<4x16x1xf32> to vector<4x16x256xf32>
    %27 = arith.addf %25, %26 : vector<4x16x256xf32>
    %c0_13 = arith.constant 0 : index
    %c0_14 = arith.constant 0 : index
    %c0_15 = arith.constant 0 : index
    %28 = vector.load %arg4[%c0_13, %c0_14, %c0_15] : memref<4x16x256xf32, #tpu.memory_space<vmem>>, vector<4x16x256xf32>
    tpu.vector_store %arg4[%c0_13, %c0_14, %c0_15], %27 {strides = array<i32>} : memref<4x16x256xf32, #tpu.memory_space<vmem>>, vector<4x16x256xf32>,
    return
  }
  func.func @transform_0(%arg0: i32) -> (i32, i32, i32) {
    %c0_i32 = arith.constant 0 : i32
    %c0_i32_0 = arith.constant 0 : i32
    %c0_i32_1 = arith.constant 0 : i32
    return %c0_i32, %arg0, %c0_i32_0 : i32, i32, i32
  }
  func.func @transform_1(%arg0: i32) -> (i32, i32, i32) {
    %c0_i32 = arith.constant 0 : i32
    %c0_i32_0 = arith.constant 0 : i32
    %c0_i32_1 = arith.constant 0 : i32
    return %c0_i32, %arg0, %c0_i32_0 : i32, i32, i32
  }
  func.func @transform_2(%arg0: i32) -> (i32, i32, i32) {
    %c0_i32 = arith.constant 0 : i32
    %c0_i32_0 = arith.constant 0 : i32
    %c0_i32_1 = arith.constant 0 : i32
    return %c0_i32, %arg0, %c0_i32_0 : i32, i32, i32
  }
  func.func @transform_3(%arg0: i32) -> (i32, i32, i32) {
    %c0_i32 = arith.constant 0 : i32
    %c0_i32_0 = arith.constant 0 : i32
    %c0_i32_1 = arith.constant 0 : i32
    return %c0_i32, %arg0, %c0_i32_0 : i32, i32, i32
  }
}

</mosaic_0001>

<llo_original>
// kernel: tpu_custom_call.1
$region0: #{tpu_custom_call.1}
  #allocation0 [shape = 'u32[]', space=smem, size = 0x4, offset = 0x4, fixed_abs, tag = 'smem constant byte address 0x4 - core index']
  #allocation1 [shape = 'u32[72,128]{1,0:T(1,128)}', space=vmem, size = 0x9000, scoped, tag = 'internal scratch']
  #allocation7 [shape = 's32[]', space=sflag, size = 0x4, offset = 0, fixed_abs, tag = 'sflag constant byte address 0x0 - dummy sync flag']
  %s0 = inlined_call_operand.vmem [shape: f32[4,32,1], index: 0, kind: input, shape index: {}]
  %s1 = inlined_call_operand.vmem [shape: f32[4,32,1], index: 1, kind: input, shape index: {}]
  %s2 = inlined_call_operand.vmem [shape: f32[4,32,256], index: 2, kind: input, shape index: {}]
  %s3 = inlined_call_operand.hbm [shape: f32[4,32,256], index: 3, kind: output, shape index: {}]
  %s4 = sld [smem:[#allocation0]]
  $region144: #{tpu_custom_call.1} parent=0
    _
  %s6 = ssub.s32 1, %s4
  %s7 = scalar_select 0, %s6, %s4
  $region1: #{tpu_custom_call.1} parent=0
    #allocation2 [shape = 'u8[65536]{0}', space=vmem, size = 0x10000, scoped, tag = 'input window, operand 0']
    #allocation3 [shape = 'u8[65536]{0}', space=vmem, size = 0x10000, scoped, tag = 'input window, operand 1']
    #allocation4 [shape = 'u8[131072]{0}', space=vmem, size = 0x20000, scoped, tag = 'input window, operand 2']
    #allocation5 [shape = 'u8[131072]{0}', space=vmem, size = 0x20000, scoped, tag = 'output window, operand 0']
    #allocation6 [shape = 's32[2]{0}', space=sflag, size = 0x8, scoped, tag = 'scoped memory for tpu_custom_call.1']
    %8 = vsyncpa [#allocation6], 0
    %s9 = scalar_lea.sflag [#allocation6], 1
    %10 = vsyncpa %s9, 0
    loop: start=0, step=1, limit=4
    $region2: #{tpu_custom_call.1} parent=1 // loop_pre_header
      _
    $region3: #{tpu_custom_call.1} parent=1 // loop_header
      %s12 = sphi 0, %s16
      %p13 = scmp.ge.s32.totalorder %s12, 4
      %s22 = sphi 0, %s24
      %s25 = sphi 0, %s22
      %s26 = sphi 0, %s25
      %s42 = sphi 0, %s26
      %s48 = sphi 0, %s50
      %s51 = sphi 0, %s48
      %s52 = sphi 0, %s51
      %s68 = sphi 0, %s52
      %s74 = sphi 0, %s76
      %s77 = sphi 0, %s74
      %s78 = sphi 0, %s77
      %s94 = sphi 0, %s78
      %s100 = sphi 0, %s102
      %s103 = sphi 0, %s100
      %s104 = sphi 0, %s103
      %s120 = sphi 0, %s104
    $region4: #{tpu_custom_call.1} parent=1 // loop_header_branch
      %15 = sbr.rel (%p13) target = $region8
    $region5: #{tpu_custom_call.1} parent=1 // loop_body
      %s17 = ssub.s32 %s12, 1
      %s18 = ssub.s32 %s12, 2
      %s19 = sadd.s32 %s12, 1
      %s20 = ssub.s32 %s12, %s19
      %p21 = scmp.eq.s32.totalorder %s20, 0
      %s23 = sadd.s32 %s22, 1
      %s24 = scalar_select %p21, %s22, %s23
      %p27 = pneg %p21
      %p28 = scmp.eq.s32.totalorder %s12, 1
      %p29 = por %p27, %p28
      %p30 = scmp.ne.s32.totalorder %s22, %s25
      %p31 = scmp.eq.s32.totalorder %s12, 0
      %p32 = por %p30, %p31
      %p33 = scmp.ne.s32.totalorder %s22, %s25
      %p34 = scmp.eq.s32.totalorder %s17, 1
      %p35 = por %p33, %p34
      %p36 = scmp.ne.s32.totalorder %s25, %s26
      %p37 = scmp.eq.s32.totalorder %s17, 0
      %p38 = por %p36, %p37
      %p39 = scmp.ne.s32.totalorder %s25, %s26
      %p40 = scmp.eq.s32.totalorder %s18, 1
      %p41 = por %p39, %p40
      %p43 = scmp.ne.s32.totalorder %s26, %s42
      %p44 = scmp.eq.s32.totalorder %s18, 0
      %p45 = por %p43, %p44
      %s46 = ssub.s32 %s12, %s19
      %p47 = scmp.eq.s32.totalorder %s46, 0
      %s49 = sadd.s32 %s48, 1
      %s50 = scalar_select %p47, %s48, %s49
      %p53 = pneg %p47
      %p54 = scmp.eq.s32.totalorder %s12, 1
      %p55 = por %p53, %p54
      %p56 = scmp.ne.s32.totalorder %s48, %s51
      %p57 = scmp.eq.s32.totalorder %s12, 0
      %p58 = por %p56, %p57
      %p59 = scmp.ne.s32.totalorder %s48, %s51
      %p60 = scmp.eq.s32.totalorder %s17, 1
      %p61 = por %p59, %p60
      %p62 = scmp.ne.s32.totalorder %s51, %s52
      %p63 = scmp.eq.s32.totalorder %s17, 0
      %p64 = por %p62, %p63
      %p65 = scmp.ne.s32.totalorder %s51, %s52
      %p66 = scmp.eq.s32.totalorder %s18, 1
      %p67 = por %p65, %p66
      %p69 = scmp.ne.s32.totalorder %s52, %s68
      %p70 = scmp.eq.s32.totalorder %s18, 0
      %p71 = por %p69, %p70
      %s72 = ssub.s32 %s12, %s19
      %p73 = scmp.eq.s32.totalorder %s72, 0
      %s75 = sadd.s32 %s74, 1
      %s76 = scalar_select %p73, %s74, %s75
      %p79 = pneg %p73
      %p80 = scmp.eq.s32.totalorder %s12, 1
      %p81 = por %p79, %p80
      %p82 = scmp.ne.s32.totalorder %s74, %s77
      %p83 = scmp.eq.s32.totalorder %s12, 0
      %p84 = por %p82, %p83
      %p85 = scmp.ne.s32.totalorder %s74, %s77
      %p86 = scmp.eq.s32.totalorder %s17, 1
      %p87 = por %p85, %p86
      %p88 = scmp.ne.s32.totalorder %s77, %s78
      %p89 = scmp.eq.s32.totalorder %s17, 0
      %p90 = por %p88, %p89
      %p91 = scmp.ne.s32.totalorder %s77, %s78
      %p92 = scmp.eq.s32.totalorder %s18, 1
      %p93 = por %p91, %p92
      %p95 = scmp.ne.s32.totalorder %s78, %s94
      %p96 = scmp.eq.s32.totalorder %s18, 0
      %p97 = por %p95, %p96
      %s98 = ssub.s32 %s12, %s19
      %p99 = scmp.eq.s32.totalorder %s98, 0
      %s101 = sadd.s32 %s100, 1
      %s102 = scalar_select %p99, %s100, %s101
      %p105 = pneg %p99
      %p106 = scmp.eq.s32.totalorder %s12, 1
      %p107 = por %p105, %p106
      %p108 = scmp.ne.s32.totalorder %s100, %s103
      %p109 = scmp.eq.s32.totalorder %s12, 0
      %p110 = por %p108, %p109
      %p111 = scmp.ne.s32.totalorder %s100, %s103
      %p112 = scmp.eq.s32.totalorder %s17, 1
      %p113 = por %p111, %p112
      %p114 = scmp.ne.s32.totalorder %s103, %s104
      %p115 = scmp.eq.s32.totalorder %s17, 0
      %p116 = por %p114, %p115
      %p117 = scmp.ne.s32.totalorder %s103, %s104
      %p118 = scmp.eq.s32.totalorder %s18, 1
      %p119 = por %p117, %p118
      %p121 = scmp.ne.s32.totalorder %s104, %s120
      %p122 = scmp.eq.s32.totalorder %s18, 0
      %p123 = por %p121, %p122
      %p124 = scmp.le.s32.totalorder 1, %s12
      %p125 = scmp.lt.s32.totalorder %s12, 3
      %p126 = pnand %p124, %p125
      %p127 = pneg %p126
      // Predicated region
      $region9: #{tpu_custom_call.1} parent=5 // pred_check
        _
      $region10: #{tpu_custom_call.1} parent=5 // pred_check_branch
        %129 = sbr.rel (%p126) target = $region12
      $region11: #{tpu_custom_call.1} parent=5 // pred_region
        %s130 = ssub.s32 %s12, 1
      $region12: #{tpu_custom_call.1} parent=5 // pred_fallthru
        _
      %p131 = scmp.lt.s32.totalorder %s12, 2
      // Predicated region
      $region13: #{tpu_custom_call.1} parent=5 // pred_check
        %p132 = pneg %p131
      $region14: #{tpu_custom_call.1} parent=5 // pred_check_branch
        %134 = sbr.rel (%p132) target = $region16
      $region15: #{tpu_custom_call.1} parent=5 // pred_region
        // Predicated region
        $region17: #{tpu_custom_call.1} parent=15 // pred_check
          %p135 = pneg %p32
        $region18: #{tpu_custom_call.1} parent=15 // pred_check_branch
          %137 = sbr.rel (%p135) target = $region20
        $region19: #{tpu_custom_call.1} parent=15 // pred_region
          %s138 = sand.u32 %s22, 1
          %s139 = sand.u32 %s22, 1
          %s140 = smul.addr %s139, 64
          %s141 = scalar_lea.vmem [#allocation2], %s140
          %s142 = smul.u32 2, %s12
          %s143 = smul.addr %s142, 8
          %s144 = scalar_lea.vmem %s0, %s143
          // Predicated region
          $region21: #{tpu_custom_call.1} parent=19 // pred_check
            _
          $region22: #{tpu_custom_call.1} parent=19 // pred_check_branch
            %146 = sbr.rel (0) target = $region24
          $region23: #{tpu_custom_call.1} parent=19 // pred_region
            // Predicated region
            $region25: #{tpu_custom_call.1} parent=23 // pred_check
              _
            $region26: #{tpu_custom_call.1} parent=23 // pred_check_branch
              %148 = sbr.rel (0) target = $region28
            $region27: #{tpu_custom_call.1} parent=23 // pred_region
              // Predicated region
              $region40: #{tpu_custom_call.1} parent=27 // pred_check
                _
              $region41: #{tpu_custom_call.1} parent=27 // pred_check_branch
                %178 = sbr.rel (0) target = $region43
              $region42: #{tpu_custom_call.1} parent=27 // pred_region
                loop: start=0, step=1, limit=1
                $region44: #{tpu_custom_call.1} parent=42 // loop_pre_header
                  _
                $region45: #{tpu_custom_call.1} parent=42 // loop_header
                  %s180 = sphi 0, %s184
                  %p181 = scmp.ge.s32.totalorder %s180, 1
                  %s185 = sphi %s144, %s144
                  %s186 = sphi %s141, %s141
                $region46: #{tpu_custom_call.1} parent=42 // loop_header_branch
                  %183 = sbr.rel (%p181) target = $region50
                $region47: #{tpu_custom_call.1} parent=42 // loop_body
                  %v187 = vld [vmem:[%s185] sm:$0xff]
                  %188 = vst [vmem:[%s186] sm:$0xff] %v187
                  %v189 = vld [vmem:[%s185 + $0x8] sm:$0xff]
                  %190 = vst [vmem:[%s186 + $0x8] sm:$0xff] %v189
                  %v191 = vld [vmem:[%s185 + $0x20] sm:$0xff]
                  %192 = vst [vmem:[%s186 + $0x10] sm:$0xff] %v191
                  %v193 = vld [vmem:[%s185 + $0x28] sm:$0xff]
                  %194 = vst [vmem:[%s186 + $0x18] sm:$0xff] %v193
                  %v195 = vld [vmem:[%s185 + $0x40] sm:$0xff]
                  %196 = vst [vmem:[%s186 + $0x20] sm:$0xff] %v195
                  %v197 = vld [vmem:[%s185 + $0x48] sm:$0xff]
                  %198 = vst [vmem:[%s186 + $0x28] sm:$0xff] %v197
                  %v199 = vld [vmem:[%s185 + $0x60] sm:$0xff]
                  %200 = vst [vmem:[%s186 + $0x30] sm:$0xff] %v199
                  %v201 = vld [vmem:[%s185 + $0x68] sm:$0xff]
                  %202 = vst [vmem:[%s186 + $0x38] sm:$0xff] %v201
                $region48: #{tpu_custom_call.1} parent=42 // loop_footer
                  %s184 = sadd.s32 1, %s180
                $region49: #{tpu_custom_call.1} parent=42 // loop_footer_branch
                  %179 = sbr.rel target = $region45
                $region50: #{tpu_custom_call.1} parent=42 // loop_exit
                  _
              $region43: #{tpu_custom_call.1} parent=27 // pred_fallthru
                _
              // Predicated region
              $region51: #{tpu_custom_call.1} parent=27 // pred_check
                _
              $region52: #{tpu_custom_call.1} parent=27 // pred_check_branch
                %204 = sbr.rel target = $region54
              $region53: #{tpu_custom_call.1} parent=27 // pred_region
                _
              $region54: #{tpu_custom_call.1} parent=27 // pred_fallthru
                _
            $region28: #{tpu_custom_call.1} parent=23 // pred_fallthru
              _
            // Predicated region
            $region29: #{tpu_custom_call.1} parent=23 // pred_check
              _
            $region30: #{tpu_custom_call.1} parent=23 // pred_check_branch
              %150 = sbr.rel target = $region32
            $region31: #{tpu_custom_call.1} parent=23 // pred_region
              %s152 = ssub.s32 256, 1
              loop: start=0, step=1, limit=1
              $region33: #{tpu_custom_call.1} parent=31 // loop_pre_header
                _
              $region34: #{tpu_custom_call.1} parent=31 // loop_header
                %s154 = sphi 0, %s158
                %p155 = scmp.ge.s32.totalorder %s154, 1
                %s159 = sphi %s144, %s144
                %s160 = sphi %s141, %s141
              $region35: #{tpu_custom_call.1} parent=31 // loop_header_branch
                %157 = sbr.rel (%p155) target = $region39
              $region36: #{tpu_custom_call.1} parent=31 // loop_body
                %v161 = vld [vmem:[%s159] sm:%s152]
                %162 = vst [vmem:[%s160] sm:%s152] %v161
                %v163 = vld [vmem:[%s159 + $0x8] sm:%s152]
                %164 = vst [vmem:[%s160 + $0x8] sm:%s152] %v163
                %v165 = vld [vmem:[%s159 + $0x20] sm:%s152]
                %166 = vst [vmem:[%s160 + $0x10] sm:%s152] %v165
                %v167 = vld [vmem:[%s159 + $0x28] sm:%s152]
                %168 = vst [vmem:[%s160 + $0x18] sm:%s152] %v167
                %v169 = vld [vmem:[%s159 + $0x40] sm:%s152]
                %170 = vst [vmem:[%s160 + $0x20] sm:%s152] %v169
                %v171 = vld [vmem:[%s159 + $0x48] sm:%s152]
                %172 = vst [vmem:[%s160 + $0x28] sm:%s152] %v171
                %v173 = vld [vmem:[%s159 + $0x60] sm:%s152]
                %174 = vst [vmem:[%s160 + $0x30] sm:%s152] %v173
                %v175 = vld [vmem:[%s159 + $0x68] sm:%s152]
                %176 = vst [vmem:[%s160 + $0x38] sm:%s152] %v175
              $region37: #{tpu_custom_call.1} parent=31 // loop_footer
                %s158 = sadd.s32 1, %s154
              $region38: #{tpu_custom_call.1} parent=31 // loop_footer_branch
                %153 = sbr.rel target = $region34
              $region39: #{tpu_custom_call.1} parent=31 // loop_exit
                _
            $region32: #{tpu_custom_call.1} parent=23 // pred_fallthru
              _
          $region24: #{tpu_custom_call.1} parent=19 // pred_fallthru
            _
          %205 = vnop
        $region20: #{tpu_custom_call.1} parent=15 // pred_fallthru
          _
        // Predicated region
        $region55: #{tpu_custom_call.1} parent=15 // pred_check
          %p206 = pneg %p58
        $region56: #{tpu_custom_call.1} parent=15 // pred_check_branch
          %208 = sbr.rel (%p206) target = $region58
        $region57: #{tpu_custom_call.1} parent=15 // pred_region
          %s209 = sand.u32 %s48, 1
          %s210 = sand.u32 %s48, 1
          %s211 = smul.addr %s210, 64
          %s212 = scalar_lea.vmem [#allocation3], %s211
          %s213 = smul.u32 2, %s12
          %s214 = smul.addr %s213, 8
          %s215 = scalar_lea.vmem %s1, %s214
          // Predicated region
          $region59: #{tpu_custom_call.1} parent=57 // pred_check
            _
          $region60: #{tpu_custom_call.1} parent=57 // pred_check_branch
            %217 = sbr.rel (0) target = $region62
          $region61: #{tpu_custom_call.1} parent=57 // pred_region
            // Predicated region
            $region63: #{tpu_custom_call.1} parent=61 // pred_check
              _
            $region64: #{tpu_custom_call.1} parent=61 // pred_check_branch
              %219 = sbr.rel (0) target = $region66
            $region65: #{tpu_custom_call.1} parent=61 // pred_region
              // Predicated region
              $region78: #{tpu_custom_call.1} parent=65 // pred_check
                _
              $region79: #{tpu_custom_call.1} parent=65 // pred_check_branch
                %249 = sbr.rel (0) target = $region81
              $region80: #{tpu_custom_call.1} parent=65 // pred_region
                loop: start=0, step=1, limit=1
                $region82: #{tpu_custom_call.1} parent=80 // loop_pre_header
                  _
                $region83: #{tpu_custom_call.1} parent=80 // loop_header
                  %s251 = sphi 0, %s255
                  %p252 = scmp.ge.s32.totalorder %s251, 1
                  %s256 = sphi %s215, %s215
                  %s257 = sphi %s212, %s212
                $region84: #{tpu_custom_call.1} parent=80 // loop_header_branch
                  %254 = sbr.rel (%p252) target = $region88
                $region85: #{tpu_custom_call.1} parent=80 // loop_body
                  %v258 = vld [vmem:[%s256] sm:$0xff]
                  %259 = vst [vmem:[%s257] sm:$0xff] %v258
                  %v260 = vld [vmem:[%s256 + $0x8] sm:$0xff]
                  %261 = vst [vmem:[%s257 + $0x8] sm:$0xff] %v260
                  %v262 = vld [vmem:[%s256 + $0x20] sm:$0xff]
                  %263 = vst [vmem:[%s257 + $0x10] sm:$0xff] %v262
                  %v264 = vld [vmem:[%s256 + $0x28] sm:$0xff]
                  %265 = vst [vmem:[%s257 + $0x18] sm:$0xff] %v264
                  %v266 = vld [vmem:[%s256 + $0x40] sm:$0xff]
                  %267 = vst [vmem:[%s257 + $0x20] sm:$0xff] %v266
                  %v268 = vld [vmem:[%s256 + $0x48] sm:$0xff]
                  %269 = vst [vmem:[%s257 + $0x28] sm:$0xff] %v268
                  %v270 = vld [vmem:[%s256 + $0x60] sm:$0xff]
                  %271 = vst [vmem:[%s257 + $0x30] sm:$0xff] %v270
                  %v272 = vld [vmem:[%s256 + $0x68] sm:$0xff]
                  %273 = vst [vmem:[%s257 + $0x38] sm:$0xff] %v272
                $region86: #{tpu_custom_call.1} parent=80 // loop_footer
                  %s255 = sadd.s32 1, %s251
                $region87: #{tpu_custom_call.1} parent=80 // loop_footer_branch
                  %250 = sbr.rel target = $region83
                $region88: #{tpu_custom_call.1} parent=80 // loop_exit
                  _
              $region81: #{tpu_custom_call.1} parent=65 // pred_fallthru
                _
              // Predicated region
              $region89: #{tpu_custom_call.1} parent=65 // pred_check
                _
              $region90: #{tpu_custom_call.1} parent=65 // pred_check_branch
                %275 = sbr.rel target = $region92
              $region91: #{tpu_custom_call.1} parent=65 // pred_region
                _
              $region92: #{tpu_custom_call.1} parent=65 // pred_fallthru
                _
            $region66: #{tpu_custom_call.1} parent=61 // pred_fallthru
              _
            // Predicated region
            $region67: #{tpu_custom_call.1} parent=61 // pred_check
              _
            $region68: #{tpu_custom_call.1} parent=61 // pred_check_branch
              %221 = sbr.rel target = $region70
            $region69: #{tpu_custom_call.1} parent=61 // pred_region
              %s223 = ssub.s32 256, 1
              loop: start=0, step=1, limit=1
              $region71: #{tpu_custom_call.1} parent=69 // loop_pre_header
                _
              $region72: #{tpu_custom_call.1} parent=69 // loop_header
                %s225 = sphi 0, %s229
                %p226 = scmp.ge.s32.totalorder %s225, 1
                %s230 = sphi %s215, %s215
                %s231 = sphi %s212, %s212
              $region73: #{tpu_custom_call.1} parent=69 // loop_header_branch
                %228 = sbr.rel (%p226) target = $region77
              $region74: #{tpu_custom_call.1} parent=69 // loop_body
                %v232 = vld [vmem:[%s230] sm:%s223]
                %233 = vst [vmem:[%s231] sm:%s223] %v232
                %v234 = vld [vmem:[%s230 + $0x8] sm:%s223]
                %235 = vst [vmem:[%s231 + $0x8] sm:%s223] %v234
                %v236 = vld [vmem:[%s230 + $0x20] sm:%s223]
                %237 = vst [vmem:[%s231 + $0x10] sm:%s223] %v236
                %v238 = vld [vmem:[%s230 + $0x28] sm:%s223]
                %239 = vst [vmem:[%s231 + $0x18] sm:%s223] %v238
                %v240 = vld [vmem:[%s230 + $0x40] sm:%s223]
                %241 = vst [vmem:[%s231 + $0x20] sm:%s223] %v240
                %v242 = vld [vmem:[%s230 + $0x48] sm:%s223]
                %243 = vst [vmem:[%s231 + $0x28] sm:%s223] %v242
                %v244 = vld [vmem:[%s230 + $0x60] sm:%s223]
                %245 = vst [vmem:[%s231 + $0x30] sm:%s223] %v244
                %v246 = vld [vmem:[%s230 + $0x68] sm:%s223]
                %247 = vst [vmem:[%s231 + $0x38] sm:%s223] %v246
              $region75: #{tpu_custom_call.1} parent=69 // loop_footer
                %s229 = sadd.s32 1, %s225
              $region76: #{tpu_custom_call.1} parent=69 // loop_footer_branch
                %224 = sbr.rel target = $region72
              $region77: #{tpu_custom_call.1} parent=69 // loop_exit
                _
            $region70: #{tpu_custom_call.1} parent=61 // pred_fallthru
              _
          $region62: #{tpu_custom_call.1} parent=57 // pred_fallthru
            _
          %276 = vnop
        $region58: #{tpu_custom_call.1} parent=15 // pred_fallthru
          _
        // Predicated region
        $region93: #{tpu_custom_call.1} parent=15 // pred_check
          %p277 = pneg %p84
        $region94: #{tpu_custom_call.1} parent=15 // pred_check_branch
          %279 = sbr.rel (%p277) target = $region96
        $region95: #{tpu_custom_call.1} parent=15 // pred_region
          %s280 = sand.u32 %s74, 1
          %s281 = sand.u32 %s74, 1
          %s282 = smul.addr %s281, 128
          %s283 = scalar_lea.vmem [#allocation4], %s282
          %s284 = smul.u32 2, %s12
          %s285 = smul.addr %s284, 2
          %s286 = smul.addr %s285, 8
          %s287 = scalar_lea.vmem %s2, %s286
          // Predicated region
          $region97: #{tpu_custom_call.1} parent=95 // pred_check
            _
          $region98: #{tpu_custom_call.1} parent=95 // pred_check_branch
            %289 = sbr.rel (0) target = $region100
          $region99: #{tpu_custom_call.1} parent=95 // pred_region
            // Predicated region
            $region101: #{tpu_custom_call.1} parent=99 // pred_check
              _
            $region102: #{tpu_custom_call.1} parent=99 // pred_check_branch
              %291 = sbr.rel (0) target = $region104
            $region103: #{tpu_custom_call.1} parent=99 // pred_region
              loop: start=0, step=1, limit=1
              $region105: #{tpu_custom_call.1} parent=103 // loop_pre_header
                _
              $region106: #{tpu_custom_call.1} parent=103 // loop_header
                %s293 = sphi 0, %s297
                %p294 = scmp.ge.s32.totalorder %s293, 1
                %s298 = sphi %s287, %s287
                %s299 = sphi %s283, %s283
              $region107: #{tpu_custom_call.1} parent=103 // loop_header_branch
                %296 = sbr.rel (%p294) target = $region111
              $region108: #{tpu_custom_call.1} parent=103 // loop_body
                %v300 = vld [vmem:[%s298] sm:$0xff]
                %301 = vst [vmem:[%s299] sm:$0xff] %v300
                %v302 = vld [vmem:[%s298 + $0x8] sm:$0xff]
                %303 = vst [vmem:[%s299 + $0x8] sm:$0xff] %v302
                %v304 = vld [vmem:[%s298 + $0x10] sm:$0xff]
                %305 = vst [vmem:[%s299 + $0x10] sm:$0xff] %v304
                %v306 = vld [vmem:[%s298 + $0x18] sm:$0xff]
                %307 = vst [vmem:[%s299 + $0x18] sm:$0xff] %v306
                %v308 = vld [vmem:[%s298 + $0x40] sm:$0xff]
                %309 = vst [vmem:[%s299 + $0x20] sm:$0xff] %v308
                %v310 = vld [vmem:[%s298 + $0x48] sm:$0xff]
                %311 = vst [vmem:[%s299 + $0x28] sm:$0xff] %v310
                %v312 = vld [vmem:[%s298 + $0x50] sm:$0xff]
                %313 = vst [vmem:[%s299 + $0x30] sm:$0xff] %v312
                %v314 = vld [vmem:[%s298 + $0x58] sm:$0xff]
                %315 = vst [vmem:[%s299 + $0x38] sm:$0xff] %v314
                %v316 = vld [vmem:[%s298 + $0x80] sm:$0xff]
                %317 = vst [vmem:[%s299 + $0x40] sm:$0xff] %v316
                %v318 = vld [vmem:[%s298 + $0x88] sm:$0xff]
                %319 = vst [vmem:[%s299 + $0x48] sm:$0xff] %v318
                %v320 = vld [vmem:[%s298 + $0x90] sm:$0xff]
                %321 = vst [vmem:[%s299 + $0x50] sm:$0xff] %v320
                %v322 = vld [vmem:[%s298 + $0x98] sm:$0xff]
                %323 = vst [vmem:[%s299 + $0x58] sm:$0xff] %v322
                %v324 = vld [vmem:[%s298 + $0xc0] sm:$0xff]
                %325 = vst [vmem:[%s299 + $0x60] sm:$0xff] %v324
                %v326 = vld [vmem:[%s298 + $0xc8] sm:$0xff]
                %327 = vst [vmem:[%s299 + $0x68] sm:$0xff] %v326
                %v328 = vld [vmem:[%s298 + $0xd0] sm:$0xff]
                %329 = vst [vmem:[%s299 + $0x70] sm:$0xff] %v328
                %v330 = vld [vmem:[%s298 + $0xd8] sm:$0xff]
                %331 = vst [vmem:[%s299 + $0x78] sm:$0xff] %v330
              $region109: #{tpu_custom_call.1} parent=103 // loop_footer
                %s297 = sadd.s32 1, %s293
              $region110: #{tpu_custom_call.1} parent=103 // loop_footer_branch
                %292 = sbr.rel target = $region106
              $region111: #{tpu_custom_call.1} parent=103 // loop_exit
                _
            $region104: #{tpu_custom_call.1} parent=99 // pred_fallthru
              _
            // Predicated region
            $region112: #{tpu_custom_call.1} parent=99 // pred_check
              _
            $region113: #{tpu_custom_call.1} parent=99 // pred_check_branch
              %333 = sbr.rel target = $region115
            $region114: #{tpu_custom_call.1} parent=99 // pred_region
              _
            $region115: #{tpu_custom_call.1} parent=99 // pred_fallthru
              _
          $region100: #{tpu_custom_call.1} parent=95 // pred_fallthru
            _
          %334 = vnop
        $region96: #{tpu_custom_call.1} parent=15 // pred_fallthru
          _
      $region16: #{tpu_custom_call.1} parent=5 // pred_fallthru
        _
      %p335 = scmp.le.s32.totalorder 1, %s12
      %p336 = scmp.lt.s32.totalorder %s12, 3
      %p337 = pnand %p335, %p336
      %p338 = pneg %p337
      // Predicated region
      $region116: #{tpu_custom_call.1} parent=5 // pred_check
        _
      $region117: #{tpu_custom_call.1} parent=5 // pred_check_branch
        %340 = sbr.rel (%p337) target = $region119
      $region118: #{tpu_custom_call.1} parent=5 // pred_region
        %s341 = ssub.s32 %s12, 1
        %s342 = sand.u32 %s25, 1
        %s343 = sand.u32 %s25, 1
        %s344 = smul.addr %s343, 64
        %s345 = scalar_lea.vmem [#allocation2], %s344
        // Predicated region
        $region120: #{tpu_custom_call.1} parent=118 // pred_check
          %p346 = pneg %p38
        $region121: #{tpu_custom_call.1} parent=118 // pred_check_branch
          %348 = sbr.rel (%p346) target = $region123
        $region122: #{tpu_custom_call.1} parent=118 // pred_region
          _
        $region123: #{tpu_custom_call.1} parent=118 // pred_fallthru
          _
        %s349 = sand.u32 %s51, 1
        %s350 = sand.u32 %s51, 1
        %s351 = smul.addr %s350, 64
        %s352 = scalar_lea.vmem [#allocation3], %s351
        // Predicated region
        $region124: #{tpu_custom_call.1} parent=118 // pred_check
          %p353 = pneg %p64
        $region125: #{tpu_custom_call.1} parent=118 // pred_check_branch
          %355 = sbr.rel (%p353) target = $region127
        $region126: #{tpu_custom_call.1} parent=118 // pred_region
          _
        $region127: #{tpu_custom_call.1} parent=118 // pred_fallthru
          _
        %s356 = sand.u32 %s77, 1
        %s357 = sand.u32 %s77, 1
        %s358 = smul.addr %s357, 128
        %s359 = scalar_lea.vmem [#allocation4], %s358
        // Predicated region
        $region128: #{tpu_custom_call.1} parent=118 // pred_check
          %p360 = pneg %p90
        $region129: #{tpu_custom_call.1} parent=118 // pred_check_branch
          %362 = sbr.rel (%p360) target = $region131
        $region130: #{tpu_custom_call.1} parent=118 // pred_region
          _
        $region131: #{tpu_custom_call.1} parent=118 // pred_fallthru
          _
        %s363 = sand.u32 %s25, 1
        %s364 = sand.u32 %s25, 1
        %s365 = smul.addr %s364, 64
        %s366 = scalar_lea.vmem [#allocation2], %s365
        %p367 = pneg %p38
        %p368 = pneg %p35
        %s369 = sand.u32 %s51, 1
        %s370 = sand.u32 %s51, 1
        %s371 = smul.addr %s370, 64
        %s372 = scalar_lea.vmem [#allocation3], %s371
        %p373 = pneg %p64
        %p374 = pneg %p61
        %s375 = sand.u32 %s77, 1
        %s376 = sand.u32 %s77, 1
        %s377 = smul.addr %s376, 128
        %s378 = scalar_lea.vmem [#allocation4], %s377
        %p379 = pneg %p90
        %p380 = pneg %p87
        %p381 = pneg %p116
        %p382 = pneg %p113
        %s383 = sand.u32 %s103, 1
        %s384 = scalar_lea.sflag [#allocation6], %s383
        %s385 = sand.u32 %s103, 1
        %s386 = smul.addr %s385, 128
        %s387 = scalar_lea.vmem [#allocation5], %s386
        %s388 = smul.u32 2, %s17
        %s389 = smul.u32 2, %s17
        %s390 = smul.u32 2, %s17
        %s391 = smul.u32 2, %s17
        %v392 = vld [vmem:[%s359] sm:$0xff]
        %v393 = vld [vmem:[%s359 + $0x8] sm:$0xff]
        %v394 = vld [vmem:[%s359 + $0x10] sm:$0xff]
        %v395 = vld [vmem:[%s359 + $0x18] sm:$0xff]
        %v396 = vld [vmem:[%s359 + $0x20] sm:$0xff]
        %v397 = vld [vmem:[%s359 + $0x28] sm:$0xff]
        %v398 = vld [vmem:[%s359 + $0x30] sm:$0xff]
        %v399 = vld [vmem:[%s359 + $0x38] sm:$0xff]
        %v400 = vld [vmem:[%s359 + $0x40] sm:$0xff]
        %v401 = vld [vmem:[%s359 + $0x48] sm:$0xff]
        %v402 = vld [vmem:[%s359 + $0x50] sm:$0xff]
        %v403 = vld [vmem:[%s359 + $0x58] sm:$0xff]
        %v404 = vld [vmem:[%s359 + $0x60] sm:$0xff]
        %v405 = vld [vmem:[%s359 + $0x68] sm:$0xff]
        %v406 = vld [vmem:[%s359 + $0x70] sm:$0xff]
        %v407 = vld [vmem:[%s359 + $0x78] sm:$0xff]
        %v408 = vadd.f32 %v392, %v393
        %v409 = vadd.f32 %v408, %v396
        %v410 = vadd.f32 %v409, %v397
        %v411 = vadd.f32 %v410, %v400
        %v412 = vadd.f32 %v411, %v401
        %v413 = vadd.f32 %v412, %v404
        %v414 = vadd.f32 %v413, %v405
        %415 = vadd.xlane.f32.xlu0 %v414
        %v416 = vpop.xlane.xlu0 %415
        %v417 = vadd.f32 %v394, %v395
        %v418 = vadd.f32 %v417, %v398
        %v419 = vadd.f32 %v418, %v399
        %v420 = vadd.f32 %v419, %v402
        %v421 = vadd.f32 %v420, %v403
        %v422 = vadd.f32 %v421, %v406
        %v423 = vadd.f32 %v422, %v407
        %424 = vadd.xlane.f32.xlu0 %v423
        %v425 = vpop.xlane.xlu0 %424
        %v426 = vmul.f32 %v392, %v392
        %v427 = vmul.f32 %v393, %v393
        %v428 = vmul.f32 %v394, %v394
        %v429 = vmul.f32 %v395, %v395
        %v430 = vmul.f32 %v396, %v396
        %v431 = vmul.f32 %v397, %v397
        %v432 = vmul.f32 %v398, %v398
        %v433 = vmul.f32 %v399, %v399
        %v434 = vmul.f32 %v400, %v400
        %v435 = vmul.f32 %v401, %v401
        %v436 = vmul.f32 %v402, %v402
        %v437 = vmul.f32 %v403, %v403
        %v438 = vmul.f32 %v404, %v404
        %v439 = vmul.f32 %v405, %v405
        %v440 = vmul.f32 %v406, %v406
        %v441 = vmul.f32 %v407, %v407
        %v442 = vadd.f32 %v426, %v427
        %v443 = vadd.f32 %v442, %v430
        %v444 = vadd.f32 %v443, %v431
        %v445 = vadd.f32 %v444, %v434
        %v446 = vadd.f32 %v445, %v435
        %v447 = vadd.f32 %v446, %v438
        %v448 = vadd.f32 %v447, %v439
        %449 = vadd.xlane.f32.xlu0 %v448
        %v450 = vpop.xlane.xlu0 %449
        %v451 = vadd.f32 %v428, %v429
        %v452 = vadd.f32 %v451, %v432
        %v453 = vadd.f32 %v452, %v433
        %v454 = vadd.f32 %v453, %v436
        %v455 = vadd.f32 %v454, %v437
        %v456 = vadd.f32 %v455, %v440
        %v457 = vadd.f32 %v456, %v441
        %458 = vadd.xlane.f32.xlu0 %v457
        %v459 = vpop.xlane.xlu0 %458
        %v460 = vmul.f32 %v416, 0.0009765625
        %v461 = vmul.f32 %v425, 0.0009765625
        %v462 = vmul.f32 %v450, 0.0009765625
        %v463 = vmul.f32 %v459, 0.0009765625
        %v464 = vmul.f32 %v460, %v460
        %v465 = vmul.f32 %v461, %v461
        %v466 = vsub.f32 %v462, %v464
        %v467 = vsub.f32 %v463, %v465
        %v468 = vmax.f32 %v466, 0.0
        %v469 = vmax.f32 %v467, 0.0
        %v470 = vadd.f32 %v468, 1e-05
        %v471 = vadd.f32 %v469, 1e-05
        %v472 = vrsqrt.pop %v470
        %v473 = vmul.f32 %v472, %v470
        %v474 = vmul.f32 %v473, %v472
        %v475 = vmul.f32 0.5, %v474
        %v476 = vsub.f32 1.5, %v475
        %v477 = vmul.f32 %v472, %v476
        %vm478 = vweird.f32 %v470
        %vm479 = vweird.f32 %v472
        %vm480 = vmor %vm478, %vm479
        %v481 = vsel %vm480, %v472, %v477
        %v482 = vrsqrt.pop %v471
        %v483 = vmul.f32 %v482, %v471
        %v484 = vmul.f32 %v483, %v482
        %v485 = vmul.f32 0.5, %v484
        %v486 = vsub.f32 1.5, %v485
        %v487 = vmul.f32 %v482, %v486
        %vm488 = vweird.f32 %v471
        %vm489 = vweird.f32 %v482
        %vm490 = vmor %vm488, %vm489
        %v491 = vsel %vm490, %v482, %v487
        %v492 = vld [vmem:[%s345] sm:$0xff]
        %v493 = vld [vmem:[%s345 + $0x8] sm:$0xff]
        %v494 = vld [vmem:[%s345 + $0x10] sm:$0xff]
        %v495 = vld [vmem:[%s345 + $0x18] sm:$0xff]
        %v496 = vld [vmem:[%s345 + $0x20] sm:$0xff]
        %v497 = vld [vmem:[%s345 + $0x28] sm:$0xff]
        %v498 = vld [vmem:[%s345 + $0x30] sm:$0xff]
        %v499 = vld [vmem:[%s345 + $0x38] sm:$0xff]
        %v500 = vld [vmem:[%s352] sm:$0xff]
        %v501 = vld [vmem:[%s352 + $0x8] sm:$0xff]
        %v502 = vld [vmem:[%s352 + $0x10] sm:$0xff]
        %v503 = vld [vmem:[%s352 + $0x18] sm:$0xff]
        %v504 = vld [vmem:[%s352 + $0x20] sm:$0xff]
        %v505 = vld [vmem:[%s352 + $0x28] sm:$0xff]
        %v506 = vld [vmem:[%s352 + $0x30] sm:$0xff]
        %v507 = vld [vmem:[%s352 + $0x38] sm:$0xff]
        %v508 = vmul.f32 %v492, %v481
        %v509 = vmul.f32 %v493, %v491
        %v510 = vmul.f32 %v494, %v481
        %v511 = vmul.f32 %v495, %v491
        %v512 = vmul.f32 %v496, %v481
        %v513 = vmul.f32 %v497, %v491
        %v514 = vmul.f32 %v498, %v481
        %v515 = vmul.f32 %v499, %v491
        %v516 = vmul.f32 %v508, %v460
        %v517 = vmul.f32 %v509, %v461
        %v518 = vmul.f32 %v510, %v460
        %v519 = vmul.f32 %v511, %v461
        %v520 = vmul.f32 %v512, %v460
        %v521 = vmul.f32 %v513, %v461
        %v522 = vmul.f32 %v514, %v460
        %v523 = vmul.f32 %v515, %v461
        %v524 = vsub.f32 %v500, %v516
        %v525 = vsub.f32 %v501, %v517
        %v526 = vsub.f32 %v502, %v518
        %v527 = vsub.f32 %v503, %v519
        %v528 = vsub.f32 %v504, %v520
        %v529 = vsub.f32 %v505, %v521
        %v530 = vsub.f32 %v506, %v522
        %v531 = vsub.f32 %v507, %v523
        %533 = vset.pattern.permute.xlu0 0
        %534 = vperm.xlu0 %533, %v508
        %v535 = vpop.permute.xlu0 %534
        %538 = vset.pattern.permute.xlu0 0
        %539 = vperm.xlu0 %538, %v509
        %v540 = vpop.permute.xlu0 %539
        %543 = vset.pattern.permute.xlu0 0
        %544 = vperm.xlu0 %543, %v510
        %v545 = vpop.permute.xlu0 %544
        %548 = vset.pattern.permute.xlu0 0
        %549 = vperm.xlu0 %548, %v511
        %v550 = vpop.permute.xlu0 %549
        %553 = vset.pattern.permute.xlu0 0
        %554 = vperm.xlu0 %553, %v512
        %v555 = vpop.permute.xlu0 %554
        %558 = vset.pattern.permute.xlu0 0
        %559 = vperm.xlu0 %558, %v513
        %v560 = vpop.permute.xlu0 %559
        %563 = vset.pattern.permute.xlu0 0
        %564 = vperm.xlu0 %563, %v514
        %v565 = vpop.permute.xlu0 %564
        %568 = vset.pattern.permute.xlu0 0
        %569 = vperm.xlu0 %568, %v515
        %v570 = vpop.permute.xlu0 %569
        %v572 = vmul.f32 %v392, %v535
        %v573 = vmul.f32 %v393, %v535
        %v574 = vmul.f32 %v394, %v540
        %v575 = vmul.f32 %v395, %v540
        %v576 = vmul.f32 %v396, %v545
        %v577 = vmul.f32 %v397, %v545
        %v578 = vmul.f32 %v398, %v550
        %v579 = vmul.f32 %v399, %v550
        %v580 = vmul.f32 %v400, %v555
        %v581 = vmul.f32 %v401, %v555
        %v582 = vmul.f32 %v402, %v560
        %v583 = vmul.f32 %v403, %v560
        %v584 = vmul.f32 %v404, %v565
        %v585 = vmul.f32 %v405, %v565
        %v586 = vmul.f32 %v406, %v570
        %v587 = vmul.f32 %v407, %v570
        %589 = vset.pattern.permute.xlu0 0
        %590 = vperm.xlu0 %589, %v524
        %v591 = vpop.permute.xlu0 %590
        %594 = vset.pattern.permute.xlu0 0
        %595 = vperm.xlu0 %594, %v525
        %v596 = vpop.permute.xlu0 %595
        %599 = vset.pattern.permute.xlu0 0
        %600 = vperm.xlu0 %599, %v526
        %v601 = vpop.permute.xlu0 %600
        %604 = vset.pattern.permute.xlu0 0
        %605 = vperm.xlu0 %604, %v527
        %v606 = vpop.permute.xlu0 %605
        %609 = vset.pattern.permute.xlu0 0
        %610 = vperm.xlu0 %609, %v528
        %v611 = vpop.permute.xlu0 %610
        %614 = vset.pattern.permute.xlu0 0
        %615 = vperm.xlu0 %614, %v529
        %v616 = vpop.permute.xlu0 %615
        %619 = vset.pattern.permute.xlu0 0
        %620 = vperm.xlu0 %619, %v530
        %v621 = vpop.permute.xlu0 %620
        %624 = vset.pattern.permute.xlu0 0
        %625 = vperm.xlu0 %624, %v531
        %v626 = vpop.permute.xlu0 %625
        %v628 = vadd.f32 %v572, %v591
        %v629 = vadd.f32 %v573, %v591
        %v630 = vadd.f32 %v574, %v596
        %v631 = vadd.f32 %v575, %v596
        %v632 = vadd.f32 %v576, %v601
        %v633 = vadd.f32 %v577, %v601
        %v634 = vadd.f32 %v578, %v606
        %v635 = vadd.f32 %v579, %v606
        %v636 = vadd.f32 %v580, %v611
        %v637 = vadd.f32 %v581, %v611
        %v638 = vadd.f32 %v582, %v616
        %v639 = vadd.f32 %v583, %v616
        %v640 = vadd.f32 %v584, %v621
        %v641 = vadd.f32 %v585, %v621
        %v642 = vadd.f32 %v586, %v626
        %v643 = vadd.f32 %v587, %v626
        %644 = vst [vmem:[%s387] sm:$0xff] %v628
        %645 = vst [vmem:[%s387 + $0x8] sm:$0xff] %v629
        %646 = vst [vmem:[%s387 + $0x10] sm:$0xff] %v630
        %647 = vst [vmem:[%s387 + $0x18] sm:$0xff] %v631
        %648 = vst [vmem:[%s387 + $0x20] sm:$0xff] %v632
        %649 = vst [vmem:[%s387 + $0x28] sm:$0xff] %v633
        %650 = vst [vmem:[%s387 + $0x30] sm:$0xff] %v634
        %651 = vst [vmem:[%s387 + $0x38] sm:$0xff] %v635
        %652 = vst [vmem:[%s387 + $0x40] sm:$0xff] %v636
        %653 = vst [vmem:[%s387 + $0x48] sm:$0xff] %v637
        %654 = vst [vmem:[%s387 + $0x50] sm:$0xff] %v638
        %655 = vst [vmem:[%s387 + $0x58] sm:$0xff] %v639
        %656 = vst [vmem:[%s387 + $0x60] sm:$0xff] %v640
        %657 = vst [vmem:[%s387 + $0x68] sm:$0xff] %v641
        %658 = vst [vmem:[%s387 + $0x70] sm:$0xff] %v642
        %659 = vst [vmem:[%s387 + $0x78] sm:$0xff] %v643
        %s660 = sand.u32 %s103, 1
        %s661 = scalar_lea.sflag [#allocation6], %s660
        %s662 = sand.u32 %s103, 1
        %s663 = smul.addr %s662, 128
        %s664 = scalar_lea.vmem [#allocation5], %s663
        // Predicated region
        $region132: #{tpu_custom_call.1} parent=118 // pred_check
          %p665 = pneg %p113
        $region133: #{tpu_custom_call.1} parent=118 // pred_check_branch
          %667 = sbr.rel (%p665) target = $region135
        $region134: #{tpu_custom_call.1} parent=118 // pred_region
          #allocation8 [shape = 'u32[6]{0}', space=smem, size = 0x18, scoped, tag = 'DMA stride descriptor']
          %s668 = smul.u32 2, %s17
          %670 = vsyncadd %s661, 0
          %s671 = smul.addr %s668, 2
          %s672 = smul.addr %s671, 8
          %s673 = scalar_lea.hbm %s3, %s672
          %s675 = sshll.u32 1, 14
          %s676 = sxor.u32 4294967295, %s675
          %s679 = sshll.u32 7, 18
          %s680 = sxor.u32 4294967295, %s679
          %s681 = sand.u32 0, %s680
          %s683 = sor.u32 %s681, 0
          %s684 = sshll.u32 %s664, 4
          %s685 = int_to_ptr.vmem [resolvable:$true] %s684
          %s686 = sshll.u32 %s673, 4
          %s687 = int_to_ptr.hbm [resolvable:$true] %s686
          %693 = sst [smem:[#allocation8]] 512
          %s694 = scalar_lea.smem [#allocation8], 1
          %695 = sst [smem:[%s694]] 1024
          %s696 = scalar_lea.smem [#allocation8], 2
          %697 = sst [smem:[%s696]] 2
          %s698 = scalar_lea.smem [#allocation8], 3
          %699 = sst [smem:[%s698]] 256
          %s700 = scalar_lea.smem [#allocation8], 4
          %701 = sst [smem:[%s700]] 256
          %s702 = scalar_lea.smem [#allocation8], 5
          %703 = sst [smem:[%s702]] 16
          %705 = dma.general %s685, 2048, %s687, %s661, [#allocation7], [#allocation8], %s683, 0
        $region135: #{tpu_custom_call.1} parent=118 // pred_fallthru
          _
      $region119: #{tpu_custom_call.1} parent=5 // pred_fallthru
        _
      %p706 = scmp.le.s32.totalorder 2, %s12
      // Predicated region
      $region136: #{tpu_custom_call.1} parent=5 // pred_check
        %p707 = pneg %p706
      $region137: #{tpu_custom_call.1} parent=5 // pred_check_branch
        %709 = sbr.rel (%p707) target = $region139
      $region138: #{tpu_custom_call.1} parent=5 // pred_region
        %s710 = ssub.s32 %s12, 2
        // Predicated region
        $region140: #{tpu_custom_call.1} parent=138 // pred_check
          %p711 = pneg %p119
        $region141: #{tpu_custom_call.1} parent=138 // pred_check_branch
          %713 = sbr.rel (%p711) target = $region143
        $region142: #{tpu_custom_call.1} parent=138 // pred_region
          %s714 = sand.u32 %s104, 1
          %s715 = scalar_lea.sflag [#allocation6], %s714
          %s716 = sand.u32 %s104, 1
          %s717 = smul.addr %s716, 128
          %s718 = scalar_lea.vmem [#allocation5], %s717
          %720 = dma.done %s715, 2048
        $region143: #{tpu_custom_call.1} parent=138 // pred_fallthru
          _
      $region139: #{tpu_custom_call.1} parent=5 // pred_fallthru
        _
    $region6: #{tpu_custom_call.1} parent=1 // loop_footer
      %s16 = sadd.s32 1, %s12
    $region7: #{tpu_custom_call.1} parent=1 // loop_footer_branch
      %11 = sbr.rel target = $region3
    $region8: #{tpu_custom_call.1} parent=1 // loop_exit
      _
    %721 = vsyncpa [#allocation6], 1
    %s722 = scalar_lea.sflag [#allocation6], 1
    %723 = vsyncpa %s722, 1

</llo_original>
